<compile_context>
chip_gen: v7x
topology: tpu7x:2x2x1
jax: 0.10.0
libtpu: 0.0.40
codegen_flags: <defaults>
</compile_context>

<pallas_src>
import functools

import jax
import jax.numpy as jnp
from jax import lax
from jax.experimental import pallas as pl
from jax.experimental.pallas import tpu as pltpu


def _round_up(x, m):
    return (x + m - 1) // m * m


def ann3layer_kernel(x_ref, w1_ref, b1_ref, w2_ref, b2_ref,
                     w3_ref, b3_ref, w4_ref, b4_ref, o_ref, *, bf16_tanh):
    """One batch tile of the fused 4-layer MLP.

    x_ref:  [TB, n_inputs] (native layout)        -> streamed
    wN_ref: [out, in], bN_ref: [out, 1]           -> VMEM-resident
    o_ref:  [n_classes, TB] (lane-dense output)   -> streamed
    """
    mxu_dtype = w1_ref.dtype                            # f32 or bf16 matmul inputs
    act_dtype = jnp.bfloat16 if bf16_tanh else jnp.float32

    x = x_ref[...].astype(mxu_dtype)                    # [TB, n_inputs]

    # layer1: W1 @ x.T  (contract feature axis of both operands) -> [neurons, TB]
    h = lax.dot_general(w1_ref[...], x,
                        dimension_numbers=(((1,), (1,)), ((), ())),
                        preferred_element_type=jnp.float32) + b1_ref[...]
    h = jnp.tanh(h.astype(act_dtype)).astype(mxu_dtype)

    # layer2 -> [neurons//2, TB]
    h = jnp.dot(w2_ref[...], h, preferred_element_type=jnp.float32) + b2_ref[...]
    h = jnp.tanh(h.astype(act_dtype)).astype(mxu_dtype)

    # layer3 -> [neurons//4, TB]
    h = jnp.dot(w3_ref[...], h, preferred_element_type=jnp.float32) + b3_ref[...]
    h = jnp.tanh(h.astype(act_dtype)).astype(mxu_dtype)

    # output -> [n_classes, TB], lane-dense store
    y = jnp.dot(w4_ref[...], h, preferred_element_type=jnp.float32) + b4_ref[...]
    o_ref[...] = y.astype(o_ref.dtype)


def ann3layer_forward(x, params, *, block_b=4096,
                      matmul_dtype=jnp.bfloat16, bf16_tanh=False):
    """x: [B, n_inputs] float32.

    params: dict name -> (W, b), PyTorch layout W [out, in], b [out, 1].
    matmul_dtype: jnp.bfloat16 (default; f32 accumulation, ~5e-2 tol) or
                  jnp.float32 (exact).
    bf16_tanh: enable only on v6e/v7x (bf16 EUP); keep False on v5e.
    """
    w1, b1 = params["layer1"]
    w2, b2 = params["layer2"]
    w3, b3 = params["layer3"]
    w4, b4 = params["output"]

    B, n_inputs = x.shape
    n_classes = w4.shape[0]

    # Pad batch only up to a 128 multiple (cheap / usually a no-op) so partial
    # tiles only ever pollute output columns that are dropped afterwards.
    b_pad = _round_up(B, 128)
    if b_pad != B:
        x = jnp.pad(x, ((0, b_pad - B), (0, 0)))

    # Batch tile: large enough to amortize grid-step overhead, small enough to
    # stay comfortably in VMEM (the native [tb, n_inputs] block pads lanes
    # n_inputs -> 128 in VMEM, hence the block_b cap).
    tb = min(_round_up(block_b, 128), b_pad)
    n_steps = pl.cdiv(b_pad, tb)
    if n_steps == 1 and b_pad >= 256:
        # v7x megacore: ensure the "parallel" batch axis has >= 2 steps so the
        # two TensorCores both get work.  No effect on v5e/v6e (1 TC).
        n_steps = 2
    tb = _round_up(pl.cdiv(b_pad, n_steps), 128)
    grid = (pl.cdiv(b_pad, tb),)

    # Small, VMEM-resident weights in the MXU dtype; biases stay f32.
    w1, w2, w3, w4 = (w.astype(matmul_dtype) for w in (w1, w2, w3, w4))

    stream_x = pl.BlockSpec((tb, n_inputs), lambda i: (i, 0))
    stream_o = pl.BlockSpec((n_classes, tb), lambda i: (0, i))
    resident = lambda a: pl.BlockSpec(a.shape, lambda i: (0, 0))

    out_t = pl.pallas_call(
        functools.partial(ann3layer_kernel, bf16_tanh=bf16_tanh),
        out_shape=jax.ShapeDtypeStruct((n_classes, b_pad), jnp.float32),
        grid=grid,
        in_specs=[stream_x,
                  resident(w1), resident(b1),
                  resident(w2), resident(b2),
                  resident(w3), resident(b3),
                  resident(w4), resident(b4)],
        out_specs=stream_o,
        compiler_params=pltpu.CompilerParams(
            dimension_semantics=("parallel",),       # shards batch on v7x (2 TCs)
            vmem_limit_bytes=32 * 1024 * 1024,       # safe on 64 MiB (v7x) / 128 MiB
        ),
    )(x, w1, b1, w2, b2, w3, b3, w4, b4)

    # Back to the PyTorch-facing [B, n_classes] layout (tiny transpose).
    return out_t[:, :B].T


def init_params(key, n_inputs, n_classes, neurons):
    """PyTorch nn.Linear-style init (U[-1/sqrt(fan_in), +]); W [out, in], b [out, 1]."""
    dims = [n_inputs, neurons, round(neurons / 2), round(neurons / 4), n_classes]
    names = ["layer1", "layer2", "layer3", "output"]
    params = {}
    for name, d_in, d_out in zip(names, dims[:-1], dims[1:]):
        key, kw, kb = jax.random.split(key, 3)
        bound = 1.0 / float(d_in) ** 0.5
        W = jax.random.uniform(kw, (d_out, d_in), jnp.float32, -bound, bound)
        b = jax.random.uniform(kb, (d_out, 1), jnp.float32, -bound, bound)
        params[name] = (W, b)
    return params


def reference_forward(x, params):
    h = x
    for name in ["layer1", "layer2", "layer3"]:
        W, b = params[name]
        h = jnp.tanh(h @ W.T + b.T)
    W, b = params["output"]
    return h @ W.T + b.T


if __name__ == "__main__":
    key = jax.random.PRNGKey(0)
    B, n_inputs, n_classes, neurons = 8, 16, 2, 32

    key, kx = jax.random.split(key)
    x = jax.random.normal(kx, (B, n_inputs), jnp.float32)
    params = init_params(key, n_inputs, n_classes, neurons)

    y_ref = reference_forward(x, params)

    # Exact f32 MXU path.
    y32 = ann3layer_forward(x, params, matmul_dtype=jnp.float32)
    jax.block_until_ready(y32)
    assert y32.shape == (B, n_classes)
    assert jnp.allclose(y32, y_ref, atol=1e-5, rtol=1e-5), "f32 mismatch vs JAX reference"

    # Default bf16 MXU path (f32 accumulation, f32 bias/tanh) — v5e/v6e/v7x safe.
    y16 = ann3layer_forward(x, params)
    jax.block_until_ready(y16)
    assert y16.shape == (B, n_classes)
    assert jnp.allclose(y16, y_ref, atol=5e-2, rtol=5e-2), "bf16 mismatch vs JAX reference"

    print("KERNEL_OK")
</pallas_src>

<mosaic_0001>
module attributes {stable_mosaic.version = 11 : i64} {
  func.func @ann3layer_kernel(%arg0: i32, %arg1: memref<128x16xf32, #tpu.memory_space<vmem>>, %arg2: memref<32x16xf32, #tpu.memory_space<vmem>>, %arg3: memref<32x1xf32, #tpu.memory_space<vmem>>, %arg4: memref<16x32xf32, #tpu.memory_space<vmem>>, %arg5: memref<16x1xf32, #tpu.memory_space<vmem>>, %arg6: memref<8x16xf32, #tpu.memory_space<vmem>>, %arg7: memref<8x1xf32, #tpu.memory_space<vmem>>, %arg8: memref<2x8xf32, #tpu.memory_space<vmem>>, %arg9: memref<2x1xf32, #tpu.memory_space<vmem>>, %arg10: memref<2x128xf32, #tpu.memory_space<vmem>>) attributes {dimension_semantics = [#tpu.dimension_semantics<parallel>], iteration_bounds = array<i64: 1>, scalar_prefetch = 0 : i64, scratch_operands = 0 : i64, tpu.core_type = #tpu.core_type<tc>, window_params = [{transform_indices = @transform_0, window_bounds = array<i64: 128, 16>}, {pipeline_mode = #tpu.pipeline_mode<synchronous>, transform_indices = @transform_1, window_bounds = array<i64: 32, 16>}, {pipeline_mode = #tpu.pipeline_mode<synchronous>, transform_indices = @transform_2, window_bounds = array<i64: 32, 1>}, {pipeline_mode = #tpu.pipeline_mode<synchronous>, transform_indices = @transform_3, window_bounds = array<i64: 16, 32>}, {pipeline_mode = #tpu.pipeline_mode<synchronous>, transform_indices = @transform_4, window_bounds = array<i64: 16, 1>}, {pipeline_mode = #tpu.pipeline_mode<synchronous>, transform_indices = @transform_5, window_bounds = array<i64: 8, 16>}, {pipeline_mode = #tpu.pipeline_mode<synchronous>, transform_indices = @transform_6, window_bounds = array<i64: 8, 1>}, {pipeline_mode = #tpu.pipeline_mode<synchronous>, transform_indices = @transform_7, window_bounds = array<i64: 2, 8>}, {pipeline_mode = #tpu.pipeline_mode<synchronous>, transform_indices = @transform_8, window_bounds = array<i64: 2, 1>}, {transform_indices = @transform_9, window_bounds = array<i64: 2, 128>}]} {
    %c0 = arith.constant 0 : index
    %c0_0 = arith.constant 0 : index
    %0 = vector.load %arg1[%c0, %c0_0] : memref<128x16xf32, #tpu.memory_space<vmem>>, vector<128x16xf32>
    %c0_1 = arith.constant 0 : index
    %c0_2 = arith.constant 0 : index
    %1 = vector.load %arg2[%c0_1, %c0_2] : memref<32x16xf32, #tpu.memory_space<vmem>>, vector<32x16xf32>
    %cst = arith.constant dense<0.000000e+00> : vector<32x128xf32>
    %2 = tpu.matmul %1, %0, %cst {dimension_numbers = #tpu.dot_dimension_numbers<[1], [1], [0], [0], [0, 0, 1, 0], [], []>} : vector<32x16xf32>, vector<128x16xf32>, vector<32x128xf32> -> vector<32x128xf32>
    %c0_3 = arith.constant 0 : index
    %c0_4 = arith.constant 0 : index
    %3 = vector.load %arg3[%c0_3, %c0_4] : memref<32x1xf32, #tpu.memory_space<vmem>>, vector<32x1xf32>
    %4 = vector.broadcast %3 : vector<32x1xf32> to vector<32x128xf32>
    %5 = arith.addf %2, %4 : vector<32x128xf32>
    %6 = math.tanh %5 : vector<32x128xf32>
    %c0_5 = arith.constant 0 : index
    %c0_6 = arith.constant 0 : index
    %7 = vector.load %arg4[%c0_5, %c0_6] : memref<16x32xf32, #tpu.memory_space<vmem>>, vector<16x32xf32>
    %cst_7 = arith.constant dense<0.000000e+00> : vector<16x128xf32>
    %8 = tpu.matmul %7, %6, %cst_7 {dimension_numbers = #tpu.dot_dimension_numbers<[1], [0], [0], [1], [0, 0, 1, 1], [], []>} : vector<16x32xf32>, vector<32x128xf32>, vector<16x128xf32> -> vector<16x128xf32>
    %c0_8 = arith.constant 0 : index
    %c0_9 = arith.constant 0 : index
    %9 = vector.load %arg5[%c0_8, %c0_9] : memref<16x1xf32, #tpu.memory_space<vmem>>, vector<16x1xf32>
    %10 = vector.broadcast %9 : vector<16x1xf32> to vector<16x128xf32>
    %11 = arith.addf %8, %10 : vector<16x128xf32>
    %12 = math.tanh %11 : vector<16x128xf32>
    %c0_10 = arith.constant 0 : index
    %c0_11 = arith.constant 0 : index
    %13 = vector.load %arg6[%c0_10, %c0_11] : memref<8x16xf32, #tpu.memory_space<vmem>>, vector<8x16xf32>
    %cst_12 = arith.constant dense<0.000000e+00> : vector<8x128xf32>
    %14 = tpu.matmul %13, %12, %cst_12 {dimension_numbers = #tpu.dot_dimension_numbers<[1], [0], [0], [1], [0, 0, 1, 1], [], []>} : vector<8x16xf32>, vector<16x128xf32>, vector<8x128xf32> -> vector<8x128xf32>
    %c0_13 = arith.constant 0 : index
    %c0_14 = arith.constant 0 : index
    %15 = vector.load %arg7[%c0_13, %c0_14] : memref<8x1xf32, #tpu.memory_space<vmem>>, vector<8x1xf32>
    %16 = vector.broadcast %15 : vector<8x1xf32> to vector<8x128xf32>
    %17 = arith.addf %14, %16 : vector<8x128xf32>
    %18 = math.tanh %17 : vector<8x128xf32>
    %c0_15 = arith.constant 0 : index
    %c0_16 = arith.constant 0 : index
    %19 = vector.load %arg8[%c0_15, %c0_16] : memref<2x8xf32, #tpu.memory_space<vmem>>, vector<2x8xf32>
    %cst_17 = arith.constant dense<0.000000e+00> : vector<2x128xf32>
    %20 = tpu.matmul %19, %18, %cst_17 {dimension_numbers = #tpu.dot_dimension_numbers<[1], [0], [0], [1], [0, 0, 1, 1], [], []>} : vector<2x8xf32>, vector<8x128xf32>, vector<2x128xf32> -> vector<2x128xf32>
    %c0_18 = arith.constant 0 : index
    %c0_19 = arith.constant 0 : index
    %21 = vector.load %arg9[%c0_18, %c0_19] : memref<2x1xf32, #tpu.memory_space<vmem>>, vector<2x1xf32>
    %22 = vector.broadcast %21 : vector<2x1xf32> to vector<2x128xf32>
    %23 = arith.addf %20, %22 : vector<2x128xf32>
    %c0_20 = arith.constant 0 : index
    %c0_21 = arith.constant 0 : index
    %24 = vector.load %arg10[%c0_20, %c0_21] : memref<2x128xf32, #tpu.memory_space<vmem>>, vector<2x128xf32>
    tpu.vector_store %arg10[%c0_20, %c0_21], %23 {strides = array<i32>} : memref<2x128xf32, #tpu.memory_space<vmem>>, vector<2x128xf32>,
    return
  }
  func.func @transform_0(%arg0: i32) -> (i32, i32) {
    %c0_i32 = arith.constant 0 : i32
    %c0_i32_0 = arith.constant 0 : i32
    return %arg0, %c0_i32 : i32, i32
  }
  func.func @transform_1(%arg0: i32) -> (i32, i32) {
    %c0_i32 = arith.constant 0 : i32
    %c0_i32_0 = arith.constant 0 : i32
    %c0_i32_1 = arith.constant 0 : i32
    return %c0_i32, %c0_i32_0 : i32, i32
  }
  func.func @transform_2(%arg0: i32) -> (i32, i32) {
    %c0_i32 = arith.constant 0 : i32
    %c0_i32_0 = arith.constant 0 : i32
    %c0_i32_1 = arith.constant 0 : i32
    return %c0_i32, %c0_i32_0 : i32, i32
  }
  func.func @transform_3(%arg0: i32) -> (i32, i32) {
    %c0_i32 = arith.constant 0 : i32
    %c0_i32_0 = arith.constant 0 : i32
    %c0_i32_1 = arith.constant 0 : i32
    return %c0_i32, %c0_i32_0 : i32, i32
  }
  func.func @transform_4(%arg0: i32) -> (i32, i32) {
    %c0_i32 = arith.constant 0 : i32
    %c0_i32_0 = arith.constant 0 : i32
    %c0_i32_1 = arith.constant 0 : i32
    return %c0_i32, %c0_i32_0 : i32, i32
  }
  func.func @transform_5(%arg0: i32) -> (i32, i32) {
    %c0_i32 = arith.constant 0 : i32
    %c0_i32_0 = arith.constant 0 : i32
    %c0_i32_1 = arith.constant 0 : i32
    return %c0_i32, %c0_i32_0 : i32, i32
  }
  func.func @transform_6(%arg0: i32) -> (i32, i32) {
    %c0_i32 = arith.constant 0 : i32
    %c0_i32_0 = arith.constant 0 : i32
    %c0_i32_1 = arith.constant 0 : i32
    return %c0_i32, %c0_i32_0 : i32, i32
  }
  func.func @transform_7(%arg0: i32) -> (i32, i32) {
    %c0_i32 = arith.constant 0 : i32
    %c0_i32_0 = arith.constant 0 : i32
    %c0_i32_1 = arith.constant 0 : i32
    return %c0_i32, %c0_i32_0 : i32, i32
  }
  func.func @transform_8(%arg0: i32) -> (i32, i32) {
    %c0_i32 = arith.constant 0 : i32
    %c0_i32_0 = arith.constant 0 : i32
    %c0_i32_1 = arith.constant 0 : i32
    return %c0_i32, %c0_i32_0 : i32, i32
  }
  func.func @transform_9(%arg0: i32) -> (i32, i32) {
    %c0_i32 = arith.constant 0 : i32
    %c0_i32_0 = arith.constant 0 : i32
    return %c0_i32, %arg0 : i32, i32
  }
}

</mosaic_0001>

<llo_original>
// kernel: tpu_custom_call.1
$region0: #{tpu_custom_call.1}
  #allocation0 [shape = 'u32[]', space=smem, size = 0x4, offset = 0x4, fixed_abs, tag = 'smem constant byte address 0x4 - core index']
  #allocation1 [shape = 'u32[144,128]{1,0:T(1,128)}', space=vmem, size = 0x12000, scoped, tag = 'internal scratch']
  %s0 = inlined_call_operand.vmem [shape: f32[128,16], index: 0, kind: input, shape index: {}]
  %s1 = inlined_call_operand.vmem [shape: f32[32,16], index: 1, kind: input, shape index: {}]
  %s2 = inlined_call_operand.vmem [shape: f32[32,1], index: 2, kind: input, shape index: {}]
  %s3 = inlined_call_operand.vmem [shape: f32[16,32], index: 3, kind: input, shape index: {}]
  %s4 = inlined_call_operand.vmem [shape: f32[16,1], index: 4, kind: input, shape index: {}]
  %s5 = inlined_call_operand.vmem [shape: f32[8,16], index: 5, kind: input, shape index: {}]
  %s6 = inlined_call_operand.vmem [shape: f32[8,1], index: 6, kind: input, shape index: {}]
  %s7 = inlined_call_operand.vmem [shape: f32[2,8], index: 7, kind: input, shape index: {}]
  %s8 = inlined_call_operand.vmem [shape: f32[2,1], index: 8, kind: input, shape index: {}]
  %s9 = inlined_call_operand.hbm [shape: f32[2,128], index: 9, kind: output, shape index: {}]
  %s10 = sld [smem:[#allocation0]]
  $region46: #{tpu_custom_call.1} parent=0
    _
  %s12 = ssub.s32 1, %s10
  %s13 = scalar_select 0, %s12, %s10
  $region1: #{tpu_custom_call.1} parent=0
    #allocation2 [shape = 'u8[1024]{0}', space=vmem, size = 0x400, scoped, tag = 'output window, operand 0, single buffered']
    #allocation3 [shape = 's32[1]{0}', space=sflag, size = 0x4, scoped, tag = 'scoped memory for tpu_custom_call.1']
    %14 = vsyncpa [#allocation3], 0
    // Predicated region
    $region2: #{tpu_custom_call.1} parent=1 // pred_check
      _
    $region3: #{tpu_custom_call.1} parent=1 // pred_check_branch
      %16 = sbr.rel (0) target = $region5
    $region4: #{tpu_custom_call.1} parent=1 // pred_region
      _
    $region5: #{tpu_custom_call.1} parent=1 // pred_fallthru
      _
    // Predicated region
    $region6: #{tpu_custom_call.1} parent=1 // pred_check
      _
    $region7: #{tpu_custom_call.1} parent=1 // pred_check_branch
      %18 = sbr.rel (0) target = $region9
    $region8: #{tpu_custom_call.1} parent=1 // pred_region
      _
    $region9: #{tpu_custom_call.1} parent=1 // pred_fallthru
      _
    // Predicated region
    $region10: #{tpu_custom_call.1} parent=1 // pred_check
      _
    $region11: #{tpu_custom_call.1} parent=1 // pred_check_branch
      %20 = sbr.rel (0) target = $region13
    $region12: #{tpu_custom_call.1} parent=1 // pred_region
      _
    $region13: #{tpu_custom_call.1} parent=1 // pred_fallthru
      _
    // Predicated region
    $region14: #{tpu_custom_call.1} parent=1 // pred_check
      _
    $region15: #{tpu_custom_call.1} parent=1 // pred_check_branch
      %22 = sbr.rel (0) target = $region17
    $region16: #{tpu_custom_call.1} parent=1 // pred_region
      _
    $region17: #{tpu_custom_call.1} parent=1 // pred_fallthru
      _
    // Predicated region
    $region18: #{tpu_custom_call.1} parent=1 // pred_check
      _
    $region19: #{tpu_custom_call.1} parent=1 // pred_check_branch
      %24 = sbr.rel (0) target = $region21
    $region20: #{tpu_custom_call.1} parent=1 // pred_region
      _
    $region21: #{tpu_custom_call.1} parent=1 // pred_fallthru
      _
    // Predicated region
    $region22: #{tpu_custom_call.1} parent=1 // pred_check
      _
    $region23: #{tpu_custom_call.1} parent=1 // pred_check_branch
      %26 = sbr.rel (0) target = $region25
    $region24: #{tpu_custom_call.1} parent=1 // pred_region
      _
    $region25: #{tpu_custom_call.1} parent=1 // pred_fallthru
      _
    // Predicated region
    $region26: #{tpu_custom_call.1} parent=1 // pred_check
      _
    $region27: #{tpu_custom_call.1} parent=1 // pred_check_branch
      %28 = sbr.rel (0) target = $region29
    $region28: #{tpu_custom_call.1} parent=1 // pred_region
      _
    $region29: #{tpu_custom_call.1} parent=1 // pred_fallthru
      _
    // Predicated region
    $region30: #{tpu_custom_call.1} parent=1 // pred_check
      _
    $region31: #{tpu_custom_call.1} parent=1 // pred_check_branch
      %30 = sbr.rel (0) target = $region33
    $region32: #{tpu_custom_call.1} parent=1 // pred_region
      _
    $region33: #{tpu_custom_call.1} parent=1 // pred_fallthru
      _
    // Predicated region
    $region34: #{tpu_custom_call.1} parent=1 // pred_check
      _
    $region35: #{tpu_custom_call.1} parent=1 // pred_check_branch
      %32 = sbr.rel (0) target = $region37
    $region36: #{tpu_custom_call.1} parent=1 // pred_region
      _
    $region37: #{tpu_custom_call.1} parent=1 // pred_fallthru
      _
    %v33 = vld [vmem:[%s0] sm:$0xff]
    %v34 = vld [vmem:[%s0 + $0x8] sm:$0xff]
    %v35 = vld [vmem:[%s0 + $0x10] sm:$0xff]
    %v36 = vld [vmem:[%s0 + $0x18] sm:$0xff]
    %v37 = vld [vmem:[%s0 + $0x20] sm:$0xff]
    %v38 = vld [vmem:[%s0 + $0x28] sm:$0xff]
    %v39 = vld [vmem:[%s0 + $0x30] sm:$0xff]
    %v40 = vld [vmem:[%s0 + $0x38] sm:$0xff]
    %v41 = vld [vmem:[%s0 + $0x40] sm:$0xff]
    %v42 = vld [vmem:[%s0 + $0x48] sm:$0xff]
    %v43 = vld [vmem:[%s0 + $0x50] sm:$0xff]
    %v44 = vld [vmem:[%s0 + $0x58] sm:$0xff]
    %v45 = vld [vmem:[%s0 + $0x60] sm:$0xff]
    %v46 = vld [vmem:[%s0 + $0x68] sm:$0xff]
    %v47 = vld [vmem:[%s0 + $0x70] sm:$0xff]
    %v48 = vld [vmem:[%s0 + $0x78] sm:$0xff]
    %v49 = vld [vmem:[%s1] sm:$0xff]
    %v50 = vld [vmem:[%s1 + $0x8] sm:$0xff]
    %v51 = vld [vmem:[%s1 + $0x10] sm:$0xff]
    %v52 = vld [vmem:[%s1 + $0x18] sm:$0xff]
    %v53 = vld [vmem:[%s2] sm:$0xff]
    %v54 = vld [vmem:[%s2 + $0x8] sm:$0xff]
    %v55 = vld [vmem:[%s2 + $0x10] sm:$0xff]
    %v56 = vld [vmem:[%s2 + $0x18] sm:$0xff]
    %58 = vset.pattern.permute.xlu0 0
    %59 = vperm.xlu0 %58, %v53
    %v60 = vpop.permute.xlu0 %59
    %63 = vset.pattern.permute.xlu0 0
    %64 = vperm.xlu0 %63, %v54
    %v65 = vpop.permute.xlu0 %64
    %68 = vset.pattern.permute.xlu0 0
    %69 = vperm.xlu0 %68, %v55
    %v70 = vpop.permute.xlu0 %69
    %73 = vset.pattern.permute.xlu0 0
    %74 = vperm.xlu0 %73, %v56
    %v75 = vpop.permute.xlu0 %74
    %vm77 = vcmask 130048
    %v79 = vsel %vm77, %v49, 0
    %v82 = vsel %vm77, %v50, 0
    %v85 = vsel %vm77, %v51, 0
    %v88 = vsel %vm77, %v52, 0
    %v91 = vsel %vm77, %v33, 0
    %v94 = vsel %vm77, %v34, 0
    %v97 = vsel %vm77, %v35, 0
    %v100 = vsel %vm77, %v36, 0
    %v103 = vsel %vm77, %v37, 0
    %v106 = vsel %vm77, %v38, 0
    %v109 = vsel %vm77, %v39, 0
    %v112 = vsel %vm77, %v40, 0
    %v115 = vsel %vm77, %v41, 0
    %v118 = vsel %vm77, %v42, 0
    %v121 = vsel %vm77, %v43, 0
    %v124 = vsel %vm77, %v44, 0
    %v127 = vsel %vm77, %v45, 0
    %v130 = vsel %vm77, %v46, 0
    %v133 = vsel %vm77, %v47, 0
    %v136 = vsel %vm77, %v48, 0
    %138 = vmatprep.subr.mxu0 0.0
    %139 = vmatpush1.xpose.msra.mxu0 %v91
    %140 = vmatprep.subr.mxu0 0.0
    %141 = vmatpush1.xpose.msra.mxu0 %v94
    %142 = vmatprep.subr.mxu0 0.0
    %143 = vmatpush1.xpose.msra.mxu0 %v97
    %144 = vmatprep.subr.mxu0 0.0
    %145 = vmatpush1.xpose.msra.mxu0 %v100
    %146 = vmatprep.subr.mxu0 0.0
    %147 = vmatpush1.xpose.msra.mxu0 %v103
    %148 = vmatprep.subr.mxu0 0.0
    %149 = vmatpush1.xpose.msra.mxu0 %v106
    %150 = vmatprep.subr.mxu0 0.0
    %151 = vmatpush1.xpose.msra.mxu0 %v109
    %152 = vmatprep.subr.mxu0 0.0
    %153 = vmatpush1.xpose.msra.mxu0 %v112
    %154 = vmatprep.subr.mxu0 0.0
    %155 = vmatpush1.xpose.msra.mxu0 %v115
    %156 = vmatprep.subr.mxu0 0.0
    %157 = vmatpush1.xpose.msra.mxu0 %v118
    %158 = vmatprep.subr.mxu0 0.0
    %159 = vmatpush1.xpose.msra.mxu0 %v121
    %160 = vmatprep.subr.mxu0 0.0
    %161 = vmatpush1.xpose.msra.mxu0 %v124
    %162 = vmatprep.subr.mxu0 0.0
    %163 = vmatpush1.xpose.msra.mxu0 %v127
    %164 = vmatprep.subr.mxu0 0.0
    %165 = vmatpush1.xpose.msra.mxu0 %v130
    %166 = vmatprep.subr.mxu0 0.0
    %167 = vmatpush1.xpose.msra.mxu0 %v133
    %168 = vmatprep.subr.mxu0 0.0
    %169 = vmatpush1.xpose.msra.mxu0 %v136
    %170 = vmatprep.subr.mxu0 0.0
    %171 = vmatpush1.xpose.msra.mxu0 0.0
    %172 = vmatprep.subr.mxu0 0.0
    %173 = vmatpush1.xpose.msra.mxu0 0.0
    %174 = vmatprep.subr.mxu0 0.0
    %175 = vmatpush1.xpose.msra.mxu0 0.0
    %176 = vmatprep.subr.mxu0 0.0
    %177 = vmatpush1.xpose.msra.mxu0 0.0
    %178 = vmatprep.subr.mxu0 0.0
    %179 = vmatpush1.xpose.msra.mxu0 0.0
    %180 = vmatprep.subr.mxu0 0.0
    %181 = vmatpush1.xpose.msra.mxu0 0.0
    %182 = vmatprep.subr.mxu0 0.0
    %183 = vmatpush1.xpose.msra.mxu0 0.0
    %184 = vmatprep.subr.mxu0 0.0
    %185 = vmatpush1.xpose.msra.mxu0 0.0
    %186 = vmatprep.subr.mxu0 0.0
    %187 = vmatpush1.xpose.msra.mxu0 0.0
    %188 = vmatprep.subr.mxu0 0.0
    %189 = vmatpush1.xpose.msra.mxu0 0.0
    %190 = vmatprep.subr.mxu0 0.0
    %191 = vmatpush1.xpose.msra.mxu0 0.0
    %192 = vmatprep.subr.mxu0 0.0
    %193 = vmatpush1.xpose.msra.mxu0 0.0
    %194 = vmatprep.subr.mxu0 0.0
    %195 = vmatpush1.xpose.msra.mxu0 0.0
    %196 = vmatprep.subr.mxu0 0.0
    %197 = vmatpush1.xpose.msra.mxu0 0.0
    %198 = vmatprep.subr.mxu0 0.0
    %199 = vmatpush1.xpose.msra.mxu0 0.0
    %200 = vmatprep.subr.mxu0 0.0
    %201 = vmatpush1.xpose.msra.mxu0 0.0
    %202 = vmatprep.mubr.f32.mxu0 0.0
    %203 = vmatmul.mubr.f32.gmra.mrb[0].mxu0 %v79
    %v204 = vpop.f32.mrb[0].mxu0
    %v205 = vadd.f32 %v60, %v204
    %v206 = vpop.f32.mrb[0].mxu0
    %207 = vmatprep.mubr.f32.mxu0 0.0
    %208 = vmatmul.mubr.f32.gmra.mrb[0].mxu0 %v82
    %v209 = vpop.f32.mrb[0].mxu0
    %v210 = vadd.f32 %v65, %v209
    %v211 = vpop.f32.mrb[0].mxu0
    %212 = vmatprep.mubr.f32.mxu0 0.0
    %213 = vmatmul.mubr.f32.gmra.mrb[0].mxu0 %v85
    %v214 = vpop.f32.mrb[0].mxu0
    %v215 = vadd.f32 %v70, %v214
    %v216 = vpop.f32.mrb[0].mxu0
    %217 = vmatprep.mubr.f32.mxu0 0.0
    %218 = vmatmul.mubr.f32.gmra.mrb[0].mxu0 %v88
    %v219 = vpop.f32.mrb[0].mxu0
    %v220 = vadd.f32 %v75, %v219
    %v221 = vpop.f32.mrb[0].mxu0
    %222 = vdwg.mxu0
    %v223 = vtanh.pop %v205
    %v224 = vtanh.pop %v210
    %v225 = vtanh.pop %v215
    %v226 = vtanh.pop %v220
    %v227 = vld [vmem:[%s3] sm:$0xff]
    %v228 = vld [vmem:[%s3 + $0x8] sm:$0xff]
    %v229 = vld [vmem:[%s4] sm:$0xff]
    %v230 = vld [vmem:[%s4 + $0x8] sm:$0xff]
    %232 = vset.pattern.permute.xlu0 0
    %233 = vperm.xlu0 %232, %v229
    %v234 = vpop.permute.xlu0 %233
    %237 = vset.pattern.permute.xlu0 0
    %238 = vperm.xlu0 %237, %v230
    %v239 = vpop.permute.xlu0 %238
    %vm241 = vcmask 261120
    %v243 = vsel %vm241, %v227, 0
    %v246 = vsel %vm241, %v228, 0
    %248 = vmatprep.subr.mxu0 0.0
    %249 = vmatpush1.msra.mxu0 %v223
    %250 = vmatprep.subr.mxu0 0.0
    %251 = vmatpush1.msra.mxu0 %v224
    %252 = vmatprep.subr.mxu0 0.0
    %253 = vmatpush1.msra.mxu0 %v225
    %254 = vmatprep.subr.mxu0 0.0
    %255 = vmatpush1.msra.mxu0 %v226
    %256 = vmatprep.subr.mxu0 0.0
    %257 = vmatpush1.msra.mxu0 0.0
    %258 = vmatprep.subr.mxu0 0.0
    %259 = vmatpush1.msra.mxu0 0.0
    %260 = vmatprep.subr.mxu0 0.0
    %261 = vmatpush1.msra.mxu0 0.0
    %262 = vmatprep.subr.mxu0 0.0
    %263 = vmatpush1.msra.mxu0 0.0
    %264 = vmatprep.subr.mxu0 0.0
    %265 = vmatpush1.msra.mxu0 0.0
    %266 = vmatprep.subr.mxu0 0.0
    %267 = vmatpush1.msra.mxu0 0.0
    %268 = vmatprep.subr.mxu0 0.0
    %269 = vmatpush1.msra.mxu0 0.0
    %270 = vmatprep.subr.mxu0 0.0
    %271 = vmatpush1.msra.mxu0 0.0
    %272 = vmatprep.subr.mxu0 0.0
    %273 = vmatpush1.msra.mxu0 0.0
    %274 = vmatprep.subr.mxu0 0.0
    %275 = vmatpush1.msra.mxu0 0.0
    %276 = vmatprep.subr.mxu0 0.0
    %277 = vmatpush1.msra.mxu0 0.0
    %278 = vmatprep.subr.mxu0 0.0
    %279 = vmatpush1.msra.mxu0 0.0
    %280 = vmatprep.subr.mxu0 0.0
    %281 = vmatpush1.msra.mxu0 0.0
    %282 = vmatprep.subr.mxu0 0.0
    %283 = vmatpush1.msra.mxu0 0.0
    %284 = vmatprep.subr.mxu0 0.0
    %285 = vmatpush1.msra.mxu0 0.0
    %286 = vmatprep.subr.mxu0 0.0
    %287 = vmatpush1.msra.mxu0 0.0
    %288 = vmatprep.subr.mxu0 0.0
    %289 = vmatpush1.msra.mxu0 0.0
    %290 = vmatprep.subr.mxu0 0.0
    %291 = vmatpush1.msra.mxu0 0.0
    %292 = vmatprep.subr.mxu0 0.0
    %293 = vmatpush1.msra.mxu0 0.0
    %294 = vmatprep.subr.mxu0 0.0
    %295 = vmatpush1.msra.mxu0 0.0
    %296 = vmatprep.subr.mxu0 0.0
    %297 = vmatpush1.msra.mxu0 0.0
    %298 = vmatprep.subr.mxu0 0.0
    %299 = vmatpush1.msra.mxu0 0.0
    %300 = vmatprep.subr.mxu0 0.0
    %301 = vmatpush1.msra.mxu0 0.0
    %302 = vmatprep.subr.mxu0 0.0
    %303 = vmatpush1.msra.mxu0 0.0
    %304 = vmatprep.subr.mxu0 0.0
    %305 = vmatpush1.msra.mxu0 0.0
    %306 = vmatprep.subr.mxu0 0.0
    %307 = vmatpush1.msra.mxu0 0.0
    %308 = vmatprep.subr.mxu0 0.0
    %309 = vmatpush1.msra.mxu0 0.0
    %310 = vmatprep.subr.mxu0 0.0
    %311 = vmatpush1.msra.mxu0 0.0
    %312 = vmatprep.mubr.f32.mxu0 0.0
    %313 = vmatmul.mubr.f32.gmra.mrb[0].mxu0 %v243
    %v314 = vpop.f32.mrb[0].mxu0
    %v315 = vadd.f32 %v234, %v314
    %v316 = vpop.f32.mrb[0].mxu0
    %317 = vmatprep.mubr.f32.mxu0 0.0
    %318 = vmatmul.mubr.f32.gmra.mrb[0].mxu0 %v246
    %v319 = vpop.f32.mrb[0].mxu0
    %v320 = vadd.f32 %v239, %v319
    %v321 = vpop.f32.mrb[0].mxu0
    %322 = vdwg.mxu0
    %v323 = vtanh.pop %v315
    %v324 = vtanh.pop %v320
    %v325 = vld [vmem:[%s5] sm:$0xff]
    %v326 = vld [vmem:[%s6] sm:$0xff]
    %328 = vset.pattern.permute.xlu0 0
    %329 = vperm.xlu0 %328, %v326
    %v330 = vpop.permute.xlu0 %329
    %v333 = vsel %vm77, %v325, 0
    %335 = vmatprep.subr.mxu0 0.0
    %336 = vmatpush1.msra.mxu0 %v323
    %337 = vmatprep.subr.mxu0 0.0
    %338 = vmatpush1.msra.mxu0 %v324
    %339 = vmatprep.subr.mxu0 0.0
    %340 = vmatpush1.msra.mxu0 0.0
    %341 = vmatprep.subr.mxu0 0.0
    %342 = vmatpush1.msra.mxu0 0.0
    %343 = vmatprep.subr.mxu0 0.0
    %344 = vmatpush1.msra.mxu0 0.0
    %345 = vmatprep.subr.mxu0 0.0
    %346 = vmatpush1.msra.mxu0 0.0
    %347 = vmatprep.subr.mxu0 0.0
    %348 = vmatpush1.msra.mxu0 0.0
    %349 = vmatprep.subr.mxu0 0.0
    %350 = vmatpush1.msra.mxu0 0.0
    %351 = vmatprep.subr.mxu0 0.0
    %352 = vmatpush1.msra.mxu0 0.0
    %353 = vmatprep.subr.mxu0 0.0
    %354 = vmatpush1.msra.mxu0 0.0
    %355 = vmatprep.subr.mxu0 0.0
    %356 = vmatpush1.msra.mxu0 0.0
    %357 = vmatprep.subr.mxu0 0.0
    %358 = vmatpush1.msra.mxu0 0.0
    %359 = vmatprep.subr.mxu0 0.0
    %360 = vmatpush1.msra.mxu0 0.0
    %361 = vmatprep.subr.mxu0 0.0
    %362 = vmatpush1.msra.mxu0 0.0
    %363 = vmatprep.subr.mxu0 0.0
    %364 = vmatpush1.msra.mxu0 0.0
    %365 = vmatprep.subr.mxu0 0.0
    %366 = vmatpush1.msra.mxu0 0.0
    %367 = vmatprep.subr.mxu0 0.0
    %368 = vmatpush1.msra.mxu0 0.0
    %369 = vmatprep.subr.mxu0 0.0
    %370 = vmatpush1.msra.mxu0 0.0
    %371 = vmatprep.subr.mxu0 0.0
    %372 = vmatpush1.msra.mxu0 0.0
    %373 = vmatprep.subr.mxu0 0.0
    %374 = vmatpush1.msra.mxu0 0.0
    %375 = vmatprep.subr.mxu0 0.0
    %376 = vmatpush1.msra.mxu0 0.0
    %377 = vmatprep.subr.mxu0 0.0
    %378 = vmatpush1.msra.mxu0 0.0
    %379 = vmatprep.subr.mxu0 0.0
    %380 = vmatpush1.msra.mxu0 0.0
    %381 = vmatprep.subr.mxu0 0.0
    %382 = vmatpush1.msra.mxu0 0.0
    %383 = vmatprep.subr.mxu0 0.0
    %384 = vmatpush1.msra.mxu0 0.0
    %385 = vmatprep.subr.mxu0 0.0
    %386 = vmatpush1.msra.mxu0 0.0
    %387 = vmatprep.subr.mxu0 0.0
    %388 = vmatpush1.msra.mxu0 0.0
    %389 = vmatprep.subr.mxu0 0.0
    %390 = vmatpush1.msra.mxu0 0.0
    %391 = vmatprep.subr.mxu0 0.0
    %392 = vmatpush1.msra.mxu0 0.0
    %393 = vmatprep.subr.mxu0 0.0
    %394 = vmatpush1.msra.mxu0 0.0
    %395 = vmatprep.subr.mxu0 0.0
    %396 = vmatpush1.msra.mxu0 0.0
    %397 = vmatprep.subr.mxu0 0.0
    %398 = vmatpush1.msra.mxu0 0.0
    %399 = vmatprep.mubr.f32.mxu0 0.0
    %400 = vmatmul.mubr.f32.gmra.mrb[0].mxu0 %v333
    %v401 = vpop.f32.mrb[0].mxu0
    %v402 = vadd.f32 %v330, %v401
    %v403 = vpop.f32.mrb[0].mxu0
    %404 = vdwg.mxu0
    %v405 = vtanh.pop %v402
    %v406 = vld [vmem:[%s7] sm:$0x3]
    %v407 = vld [vmem:[%s8] sm:$0x3]
    %409 = vset.pattern.permute.xlu0 0
    %410 = vperm.xlu0 %409, %v407
    %v411 = vpop.permute.xlu0 %410
    %vm413 = vcmask 64512
    %v415 = vsel %vm413, %v406, 0
    %417 = vmatprep.subr.mxu0 0.0
    %418 = vmatpush1.msra.mxu0 %v405
    %419 = vmatprep.subr.mxu0 0.0
    %420 = vmatpush1.msra.mxu0 0.0
    %421 = vmatprep.subr.mxu0 0.0
    %422 = vmatpush1.msra.mxu0 0.0
    %423 = vmatprep.subr.mxu0 0.0
    %424 = vmatpush1.msra.mxu0 0.0
    %425 = vmatprep.subr.mxu0 0.0
    %426 = vmatpush1.msra.mxu0 0.0
    %427 = vmatprep.subr.mxu0 0.0
    %428 = vmatpush1.msra.mxu0 0.0
    %429 = vmatprep.subr.mxu0 0.0
    %430 = vmatpush1.msra.mxu0 0.0
    %431 = vmatprep.subr.mxu0 0.0
    %432 = vmatpush1.msra.mxu0 0.0
    %433 = vmatprep.subr.mxu0 0.0
    %434 = vmatpush1.msra.mxu0 0.0
    %435 = vmatprep.subr.mxu0 0.0
    %436 = vmatpush1.msra.mxu0 0.0
    %437 = vmatprep.subr.mxu0 0.0
    %438 = vmatpush1.msra.mxu0 0.0
    %439 = vmatprep.subr.mxu0 0.0
    %440 = vmatpush1.msra.mxu0 0.0
    %441 = vmatprep.subr.mxu0 0.0
    %442 = vmatpush1.msra.mxu0 0.0
    %443 = vmatprep.subr.mxu0 0.0
    %444 = vmatpush1.msra.mxu0 0.0
    %445 = vmatprep.subr.mxu0 0.0
    %446 = vmatpush1.msra.mxu0 0.0
    %447 = vmatprep.subr.mxu0 0.0
    %448 = vmatpush1.msra.mxu0 0.0
    %449 = vmatprep.subr.mxu0 0.0
    %450 = vmatpush1.msra.mxu0 0.0
    %451 = vmatprep.subr.mxu0 0.0
    %452 = vmatpush1.msra.mxu0 0.0
    %453 = vmatprep.subr.mxu0 0.0
    %454 = vmatpush1.msra.mxu0 0.0
    %455 = vmatprep.subr.mxu0 0.0
    %456 = vmatpush1.msra.mxu0 0.0
    %457 = vmatprep.subr.mxu0 0.0
    %458 = vmatpush1.msra.mxu0 0.0
    %459 = vmatprep.subr.mxu0 0.0
    %460 = vmatpush1.msra.mxu0 0.0
    %461 = vmatprep.subr.mxu0 0.0
    %462 = vmatpush1.msra.mxu0 0.0
    %463 = vmatprep.subr.mxu0 0.0
    %464 = vmatpush1.msra.mxu0 0.0
    %465 = vmatprep.subr.mxu0 0.0
    %466 = vmatpush1.msra.mxu0 0.0
    %467 = vmatprep.subr.mxu0 0.0
    %468 = vmatpush1.msra.mxu0 0.0
    %469 = vmatprep.subr.mxu0 0.0
    %470 = vmatpush1.msra.mxu0 0.0
    %471 = vmatprep.subr.mxu0 0.0
    %472 = vmatpush1.msra.mxu0 0.0
    %473 = vmatprep.subr.mxu0 0.0
    %474 = vmatpush1.msra.mxu0 0.0
    %475 = vmatprep.subr.mxu0 0.0
    %476 = vmatpush1.msra.mxu0 0.0
    %477 = vmatprep.subr.mxu0 0.0
    %478 = vmatpush1.msra.mxu0 0.0
    %479 = vmatprep.subr.mxu0 0.0
    %480 = vmatpush1.msra.mxu0 0.0
    %481 = vmatprep.mubr.f32.mxu0 0.0
    %482 = vmatmul.mubr.f32.gmra.mrb[0].mxu0 %v415
    %v483 = vpop.f32.mrb[0].mxu0
    %v484 = vadd.f32 %v411, %v483
    %v485 = vpop.f32.mrb[0].mxu0
    %486 = vdwg.mxu0
    %487 = vst [vmem:[#allocation2] sm:$0x3] %v484
    // Predicated region
    $region38: #{tpu_custom_call.1} parent=1 // pred_check
      _
    $region39: #{tpu_custom_call.1} parent=1 // pred_check_branch
      %489 = sbr.rel (0) target = $region41
    $region40: #{tpu_custom_call.1} parent=1 // pred_region
      %s491 = ssub.s32 32, 32
      %492 = vsyncadd [#allocation3], %s491
      %s494 = sshll.u32 [#allocation2], 4
      %s495 = int_to_ptr.vmem [resolvable:$true] %s494
      %497 = dma.vmem_to_hbm [thread:$0]  %s495, 32, %s9, [#allocation3]
    $region41: #{tpu_custom_call.1} parent=1 // pred_fallthru
      _
    // Predicated region
    $region42: #{tpu_custom_call.1} parent=1 // pred_check
      _
    $region43: #{tpu_custom_call.1} parent=1 // pred_check_branch
      %499 = sbr.rel (0) target = $region45
    $region44: #{tpu_custom_call.1} parent=1 // pred_region
      %500 = dma.done [#allocation3], 32
    $region45: #{tpu_custom_call.1} parent=1 // pred_fallthru
      _
    %501 = vsyncpa [#allocation3], 1

</llo_original>
